<compile_context>
chip_gen: v7x
topology: tpu7x:2x2x1
jax: 0.10.0
libtpu: 0.0.40
codegen_flags: <defaults>
</compile_context>

<pallas_src>
import jax
import jax.numpy as jnp
from jax.experimental import pallas as pl
from jax.experimental.pallas import tpu as pltpu

_LANE = 128
_MIB = 1024 * 1024


def _round_up(n, m):
    return ((n + m - 1) // m) * m


def _cdiv(a, b):
    return -(-a // b)


def _vmem_cap_bytes():
    """Per-generation physical VMEM capacity (bytes), conservative fallback."""
    try:
        info = pltpu.get_tpu_info()
        cap = getattr(info, "vmem_capacity_bytes", None)
        if cap:
            return int(cap)
    except Exception:
        pass
    return 64 * _MIB  # v7x per-TensorCore VMEM (smallest of v5e/v6e/v7x)


# ---------------------------------------------------------------------------
# Kernels
# ---------------------------------------------------------------------------

def _affine_small_kernel(x_ref, w_ref, b_ref, o_ref):
    # Whole arrays live in VMEM as single blocks. Cast to bf16 in-kernel
    # (free VPU filler) and accumulate in f32 on the MXU.
    acc = jnp.dot(
        x_ref[...].astype(jnp.bfloat16),
        w_ref[...].astype(jnp.bfloat16),
        preferred_element_type=jnp.float32,
    )
    o_ref[...] = acc + b_ref[...]


def _affine_tiled_kernel(x_ref, w_ref, b_ref, o_ref, acc_ref):
    # Grid = (M, N, K); K is the reduction axis ("arbitrary", last).
    k = pl.program_id(2)

    @pl.when(k == 0)
    def _init():
        acc_ref[...] = jnp.zeros_like(acc_ref)

    acc_ref[...] += jnp.dot(
        x_ref[...].astype(jnp.bfloat16),
        w_ref[...].astype(jnp.bfloat16),
        preferred_element_type=jnp.float32,
    )

    @pl.when(k == pl.num_programs(2) - 1)
    def _finalize():
        o_ref[...] = acc_ref[...] + b_ref[...]


# ---------------------------------------------------------------------------
# Wrapper
# ---------------------------------------------------------------------------

def predict(x, w, b, *, tm=None):
    """pred = x @ w + b, computed in a Pallas TPU kernel.

    Precision contract: operands are cast to bf16 for the MXU inside the
    kernel; accumulation and output are f32.

    Args:
      x: (batch, n_features) float32
      w: (n_features, n_classes) float32
      b: (n_classes,) float32
      tm: optional batch (M) tile size for the tiled path (auto if None).
    Returns:
      (batch, n_classes) float32
    """
    batch, n_features = x.shape
    n_classes = w.shape[1]

    x = x.astype(jnp.float32)
    w = w.astype(jnp.float32)
    b2 = b.reshape(1, n_classes).astype(jnp.float32)

    vmem_cap = _vmem_cap_bytes()

    # -------------------- small-batch, small-weight fast path ----------------
    # Whole arrays as single VMEM blocks (block == full dims is always legal),
    # no padding, no grid: pure launch overhead for tiny affine maps.
    whole_bytes = 4 * (batch * n_features + n_features * n_classes
                       + n_classes + batch * n_classes)
    if batch <= 512 and whole_bytes <= 8 * _MIB:
        vmem_small = int(min(max(16 * _MIB, 2 * whole_bytes + 4 * _MIB),
                             vmem_cap - 8 * _MIB))
        out = pl.pallas_call(
            _affine_small_kernel,
            out_shape=jax.ShapeDtypeStruct((batch, n_classes), jnp.float32),
            compiler_params=pltpu.CompilerParams(
                vmem_limit_bytes=vmem_small),
        )(x, w, b2)
        return out

    # -------------------- tiled (M parallel, N parallel, K reduction) --------
    f_pad = _round_up(n_features, _LANE)
    c_pad = _round_up(n_classes, _LANE)

    # K / N tiles: multiples of 256 keep the v6e/v7x MXU (2x256^2) fully
    # occupied; 128 fallback is enough for v5e (4x128^2). They must divide the
    # padded dims so every block is fully in-bounds.
    tk = 512 if f_pad % 512 == 0 else (256 if f_pad % 256 == 0 else 128)
    tn = 256 if c_pad % 256 == 0 else 128

    # M tile: default 512 (>=512-wide tiles reach ~85% of HBM roofline),
    # clamped to the (sublane-rounded) batch.
    if tm is None:
        tm = 512
    tm = max(8, min(_round_up(tm, 8), _round_up(batch, 8)))

    # VMEM budget per generation; shrink tiles until the (already
    # double-buffer-counted) block footprint fits with headroom.
    budget = max(min(vmem_cap - 16 * _MIB, 100 * _MIB), 24 * _MIB)

    def tiled_bytes(tm_, tk_, tn_):
        return (2 * tm_ * tk_ * 4        # x tile  (f32, double-buffered)
                + 2 * tk_ * tn_ * 4      # w tile  (f32, double-buffered)
                + 2 * tn_ * 4            # bias    (f32, double-buffered)
                + 2 * tm_ * tn_ * 4      # out tile (f32, double-buffered)
                + tm_ * tn_ * 4)         # f32 accumulator scratch

    while tiled_bytes(tm, tk, tn) + 2 * _MIB > budget and tm > 128:
        tm = max(128, tm // 2)
    while tiled_bytes(tm, tk, tn) + 2 * _MIB > budget and tn > 128:
        tn //= 2
    while tiled_bytes(tm, tk, tn) + 2 * _MIB > budget and tk > 128:
        tk //= 2

    # Prefer an even number of M blocks so both v7x TensorCores stay busy.
    num_m = _cdiv(batch, tm)
    if num_m > 1 and num_m % 2 == 1 and tm >= 16 and tm % 16 == 0:
        tm_half = tm // 2
        if _cdiv(batch, tm_half) % 2 == 0:
            tm = tm_half

    m_pad = _round_up(batch, tm)
    num_m = m_pad // tm
    num_n = c_pad // tn
    num_k = f_pad // tk

    # Zero-pad operands (f32; zeros are exact for the affine map). Pads on
    # already-aligned dims are no-ops.
    xp = jnp.pad(x, ((0, m_pad - batch), (0, f_pad - n_features)))
    wp = jnp.pad(w, ((0, f_pad - n_features), (0, c_pad - n_classes)))
    bp = jnp.pad(b2, ((0, 0), (0, c_pad - n_classes)))

    block_bytes = tiled_bytes(tm, tk, tn)
    vmem_limit = int(min(block_bytes + 4 * _MIB, vmem_cap - 4 * _MIB))

    cost = pl.CostEstimate(
        flops=2 * m_pad * f_pad * c_pad,
        transcendentals=0,
        bytes_accessed=int(m_pad * f_pad * 4 * num_n
                           + f_pad * c_pad * 4 * num_m
                           + c_pad * 4 * num_m
                           + m_pad * c_pad * 4),
    )

    out = pl.pallas_call(
        _affine_tiled_kernel,
        out_shape=jax.ShapeDtypeStruct((m_pad, c_pad), jnp.float32),
        grid=(num_m, num_n, num_k),
        in_specs=[
            pl.BlockSpec((tm, tk), lambda i, j, k: (i, k)),
            pl.BlockSpec((tk, tn), lambda i, j, k: (k, j)),
            pl.BlockSpec((1, tn), lambda i, j, k: (0, j)),
        ],
        out_specs=pl.BlockSpec((tm, tn), lambda i, j, k: (i, j)),
        scratch_shapes=[pltpu.VMEM((tm, tn), jnp.float32)],
        compiler_params=pltpu.CompilerParams(
            dimension_semantics=("parallel", "parallel", "arbitrary"),
            vmem_limit_bytes=vmem_limit,
        ),
        cost_estimate=cost,
    )(xp, wp, bp)

    return out[:batch, :n_classes]


def _reference(x, w, b):
    # Same numerics as the kernel: bf16 operands, f32 accumulate, f32 bias add.
    return (
        jnp.dot(x.astype(jnp.bfloat16), w.astype(jnp.bfloat16),
                preferred_element_type=jnp.float32)
        + b.astype(jnp.float32)
    )


if __name__ == "__main__":
    key = jax.random.PRNGKey(0)
    kx, kw, kb, kx2, kw2, kb2 = jax.random.split(key, 6)

    # Small shapes consistent with forward(): (batch, n_features) -> (batch, n_classes)
    batch, n_features, n_classes = 8, 32, 16
    x = jax.random.normal(kx, (batch, n_features), dtype=jnp.float32)
    # Deterministic synthetic parameters (no checkpoint loading).
    w = jax.random.normal(kw, (n_features, n_classes), dtype=jnp.float32) * 0.02
    b = jax.random.normal(kb, (n_classes,), dtype=jnp.float32) * 0.02

    pred = predict(x, w, b)
    jax.block_until_ready(pred)
    assert pred.shape == (batch, n_classes)
    assert jnp.allclose(pred, _reference(x, w, b), atol=1e-4, rtol=1e-4)

    # Exercise the tiled (M-parallel, N-parallel, K-reduction) path with
    # non-128-aligned feature/class counts and an even M grid.
    big_batch, big_features, big_classes = 1024, 384, 192
    x_big = jax.random.normal(kx2, (big_batch, big_features), dtype=jnp.float32)
    w_big = jax.random.normal(kw2, (big_features, big_classes), dtype=jnp.float32) * 0.02
    b_big = jax.random.normal(kb2, (big_classes,), dtype=jnp.float32) * 0.02

    pred_big = predict(x_big, w_big, b_big)
    jax.block_until_ready(pred_big)
    assert pred_big.shape == (big_batch, big_classes)
    assert jnp.allclose(pred_big, _reference(x_big, w_big, b_big),
                        atol=1e-3, rtol=1e-3)

    # TODO(synk): build / add_loss_op / train_on_batch / predict_on_batch are
    # abstract host-side utilities (NotImplementedError) in the base class;
    # only the documented forward() contract is implemented.
    print("KERNEL_OK")
</pallas_src>

<mosaic_0001>
module attributes {stable_mosaic.version = 11 : i64} {
  func.func @_affine_small_kernel(%arg0: memref<8x32xf32, #tpu.memory_space<vmem>>, %arg1: memref<32x16xf32, #tpu.memory_space<vmem>>, %arg2: memref<1x16xf32, #tpu.memory_space<vmem>>, %arg3: memref<8x16xf32, #tpu.memory_space<vmem>>) attributes {dimension_semantics = [], scalar_prefetch = 0 : i64, scratch_operands = 0 : i64, tpu.core_type = #tpu.core_type<tc>} {
    %c0 = arith.constant 0 : index
    %c0_0 = arith.constant 0 : index
    %0 = vector.load %arg0[%c0, %c0_0] : memref<8x32xf32, #tpu.memory_space<vmem>>, vector<8x32xf32>
    %1 = arith.truncf %0 : vector<8x32xf32> to vector<8x32xbf16>
    %c0_1 = arith.constant 0 : index
    %c0_2 = arith.constant 0 : index
    %2 = vector.load %arg1[%c0_1, %c0_2] : memref<32x16xf32, #tpu.memory_space<vmem>>, vector<32x16xf32>
    %3 = arith.truncf %2 : vector<32x16xf32> to vector<32x16xbf16>
    %cst = arith.constant dense<0.000000e+00> : vector<8x16xf32>
    %4 = tpu.matmul %1, %3, %cst {dimension_numbers = #tpu.dot_dimension_numbers<[1], [0], [0], [1], [0, 0, 1, 1], [], []>} : vector<8x32xbf16>, vector<32x16xbf16>, vector<8x16xf32> -> vector<8x16xf32>
    %c0_3 = arith.constant 0 : index
    %c0_4 = arith.constant 0 : index
    %5 = vector.load %arg2[%c0_3, %c0_4] : memref<1x16xf32, #tpu.memory_space<vmem>>, vector<1x16xf32>
    %6 = vector.broadcast %5 : vector<1x16xf32> to vector<8x16xf32>
    %7 = arith.addf %4, %6 : vector<8x16xf32>
    %c0_5 = arith.constant 0 : index
    %c0_6 = arith.constant 0 : index
    %8 = vector.load %arg3[%c0_5, %c0_6] : memref<8x16xf32, #tpu.memory_space<vmem>>, vector<8x16xf32>
    tpu.vector_store %arg3[%c0_5, %c0_6], %7 {strides = array<i32>} : memref<8x16xf32, #tpu.memory_space<vmem>>, vector<8x16xf32>,
    return
  }
}

</mosaic_0001>

<llo_original>
// kernel: tpu_custom_call.1
$region0: #{tpu_custom_call.1}
  #allocation0 [shape = 'u32[]', space=smem, size = 0x4, offset = 0x4, fixed_abs, tag = 'smem constant byte address 0x4 - core index']
  #allocation1 [shape = 'u32[144,128]{1,0:T(1,128)}', space=vmem, size = 0x12000, scoped, tag = 'internal scratch']
  %s0 = inlined_call_operand.vmem [shape: f32[8,32], index: 0, kind: input, shape index: {}]
  %s1 = inlined_call_operand.vmem [shape: f32[32,16], index: 1, kind: input, shape index: {}]
  %s2 = inlined_call_operand.vmem [shape: f32[1,16], index: 2, kind: input, shape index: {}]
  %s3 = inlined_call_operand.hbm [shape: f32[8,16], index: 3, kind: output, shape index: {}]
  %s4 = sld [smem:[#allocation0]]
  $region22: #{tpu_custom_call.1} parent=0
    _
  %s6 = ssub.s32 1, %s4
  %s7 = scalar_select 0, %s6, %s4
  $region1: #{tpu_custom_call.1} parent=0
    #allocation2 [shape = 'u8[4096]{0}', space=vmem, size = 0x1000, scoped, tag = 'output window, operand 0, single buffered']
    #allocation3 [shape = 's32[1]{0}', space=sflag, size = 0x4, scoped, tag = 'scoped memory for tpu_custom_call.1']
    %8 = vsyncpa [#allocation3], 0
    // Predicated region
    $region2: #{tpu_custom_call.1} parent=1 // pred_check
      _
    $region3: #{tpu_custom_call.1} parent=1 // pred_check_branch
      %10 = sbr.rel (0) target = $region5
    $region4: #{tpu_custom_call.1} parent=1 // pred_region
      _
    $region5: #{tpu_custom_call.1} parent=1 // pred_fallthru
      _
    // Predicated region
    $region6: #{tpu_custom_call.1} parent=1 // pred_check
      _
    $region7: #{tpu_custom_call.1} parent=1 // pred_check_branch
      %12 = sbr.rel (0) target = $region9
    $region8: #{tpu_custom_call.1} parent=1 // pred_region
      _
    $region9: #{tpu_custom_call.1} parent=1 // pred_fallthru
      _
    // Predicated region
    $region10: #{tpu_custom_call.1} parent=1 // pred_check
      _
    $region11: #{tpu_custom_call.1} parent=1 // pred_check_branch
      %14 = sbr.rel (0) target = $region13
    $region12: #{tpu_custom_call.1} parent=1 // pred_region
      _
    $region13: #{tpu_custom_call.1} parent=1 // pred_fallthru
      _
    %v16 = vld [vmem:[%s0] sm:$0xff]
    %v17 = vpack.c.bf16 %v16, %v16
    %v18 = vld [vmem:[%s1] sm:$0xff]
    %v19 = vld [vmem:[%s1 + $0x8] sm:$0xff]
    %v20 = vld [vmem:[%s1 + $0x10] sm:$0xff]
    %v21 = vld [vmem:[%s1 + $0x18] sm:$0xff]
    %v22 = vpack.c.bf16 %v19, %v18
    %v23 = vpack.c.bf16 %v21, %v20
    %v24 = vld [vmem:[%s2] sm:$0x1]
    %v26 = vlaneseq
    %v27 = vshrl.u32 %v26, 7
    %v28 = vsub.s32 0, %v27
    %v29 = vrot.slane %v24, %v28
    %vm31 = vcmask 261120
    %v33 = vsel %vm31, %v17, 0
    %35 = vmatprep.subr.bf16.mxu0 0
    %36 = vmatpush1.bf16.msra.mxu0 %v22
    %37 = vmatprep.subr.bf16.mxu0 0
    %38 = vmatpush1.bf16.msra.mxu0 %v23
    %39 = vmatprep.subr.bf16.mxu0 0
    %40 = vmatpush1.bf16.msra.mxu0 0
    %41 = vmatprep.subr.bf16.mxu0 0
    %42 = vmatpush1.bf16.msra.mxu0 0
    %43 = vmatprep.subr.bf16.mxu0 0
    %44 = vmatpush1.bf16.msra.mxu0 0
    %45 = vmatprep.subr.bf16.mxu0 0
    %46 = vmatpush1.bf16.msra.mxu0 0
    %47 = vmatprep.subr.bf16.mxu0 0
    %48 = vmatpush1.bf16.msra.mxu0 0
    %49 = vmatprep.subr.bf16.mxu0 0
    %50 = vmatpush1.bf16.msra.mxu0 0
    %51 = vmatprep.subr.bf16.mxu0 0
    %52 = vmatpush1.bf16.msra.mxu0 0
    %53 = vmatprep.subr.bf16.mxu0 0
    %54 = vmatpush1.bf16.msra.mxu0 0
    %55 = vmatprep.subr.bf16.mxu0 0
    %56 = vmatpush1.bf16.msra.mxu0 0
    %57 = vmatprep.subr.bf16.mxu0 0
    %58 = vmatpush1.bf16.msra.mxu0 0
    %59 = vmatprep.subr.bf16.mxu0 0
    %60 = vmatpush1.bf16.msra.mxu0 0
    %61 = vmatprep.subr.bf16.mxu0 0
    %62 = vmatpush1.bf16.msra.mxu0 0
    %63 = vmatprep.subr.bf16.mxu0 0
    %64 = vmatpush1.bf16.msra.mxu0 0
    %65 = vmatprep.subr.bf16.mxu0 0
    %66 = vmatpush1.bf16.msra.mxu0 0
    %67 = vmatprep.mubr.bf16.mxu0 0
    %68 = vmatmul.mubr.bf16.gmra.mrb[0].mxu0 %v33
    %v69 = vpop.f32.mrb[0].mxu0
    %v70 = vadd.f32 %v29, %v69
    %v71 = vpop.f32.mrb[0].mxu0
    %v72 = vpop.f32.mrb[0].mxu0
    %v73 = vpop.f32.mrb[0].mxu0
    %74 = vdwg.mxu0
    %vm75 = vcmask 130048
    %76 = vst.msk [vmem:[#allocation2] sm:$0xff] %vm75, %v70
    // Predicated region
    $region14: #{tpu_custom_call.1} parent=1 // pred_check
      _
    $region15: #{tpu_custom_call.1} parent=1 // pred_check_branch
      %78 = sbr.rel (0) target = $region17
    $region16: #{tpu_custom_call.1} parent=1 // pred_region
      %s80 = ssub.s32 128, 128
      %81 = vsyncadd [#allocation3], %s80
      %s83 = sshll.u32 [#allocation2], 4
      %s84 = int_to_ptr.vmem [resolvable:$true] %s83
      %86 = dma.vmem_to_hbm [thread:$0]  %s84, 128, %s3, [#allocation3]
    $region17: #{tpu_custom_call.1} parent=1 // pred_fallthru
      _
    // Predicated region
    $region18: #{tpu_custom_call.1} parent=1 // pred_check
      _
    $region19: #{tpu_custom_call.1} parent=1 // pred_check_branch
      %88 = sbr.rel (0) target = $region21
    $region20: #{tpu_custom_call.1} parent=1 // pred_region
      %89 = dma.done [#allocation3], 128
    $region21: #{tpu_custom_call.1} parent=1 // pred_fallthru
      _
    %90 = vsyncpa [#allocation3], 1

</llo_original>
